<compile_context>
chip_gen: v6e
topology: v6e:2x2x1
jax: 0.10.0
libtpu: 0.0.40
codegen_flags: <defaults>
</compile_context>

<pallas_src>
import jax
import jax.numpy as jnp
from jax.experimental import pallas as pl
from jax.experimental.pallas import tpu as pltpu

# ---------------- configuration (synthetic, small) ----------------
B = 8                  # demo batch size
NUM_USERS = 16
USER_EMBED = 16        # user_embed_size
META_SIZE = 10         # metadata_size
LANG_EMBED = 16        # language_embed_dim
HIDDEN = (32, 16)      # latent_to_params_hidden_dims
PARAM_DIM = 2          # LinRegress -> (slope, intercept)
TIMES = (20.0, 60.0, 180.0)
TEMPERATURE = 10.0
NUM_TIMES = len(TIMES)
NEG_SENTINEL = -1e30   # finite, so no inf-inf NaNs in the softmax


def _round_up(x, m):
    return (x + m - 1) // m * m


# Fused activation input lanes:
#   [ metadata (0..9) | uid-as-float (10) | const-1 bias lane (11) | 0 (12..15)
#     | one-hot(user) (16..31) ]
UID_LANE = META_SIZE                 # 10
BIAS_LANE = META_SIZE + 1            # 11
ONEHOT_OFF = 16                      # one-hot occupies [16, 16+NUM_USERS)
IN_W = ONEHOT_OFF + NUM_USERS        # 32

# Padded lane width of every hidden activation / slab column; one lane past
# HIDDEN[0] is reserved as the constant-1 lane that carries the biases.
CONST_COL = HIDDEN[0]                                   # 32
SLAB_W = _round_up(CONST_COL + 1, 8)                    # 40

# Sublane-aligned row offsets inside the single packed weight slab.
W1_OFF = 0                      # fused first-layer weight, IN_W rows
W2_OFF = W1_OFF + IN_W          # second-layer weight, SLAB_W rows
W3_OFF = W2_OFF + SLAB_W        # time-folded last-layer weight, SLAB_W rows
SLAB_ROWS = W3_OFF + SLAB_W     # 112

TILE_B = 256                    # batch rows per grid step (amortization tile)


# ---------------- Pallas kernel ----------------
def _strip_temporal_cf_kernel(x_ref, slab_ref, out_ref):
    """Forward for one batch tile, entirely in VMEM.

    x_ref   : (TB, IN_W)          f32  metadata on [0:10], uid (float) on lane 10
    slab_ref: (SLAB_ROWS, SLAB_W) f32  packed, pre-folded weights (biases inside)
    out_ref : (TB, SLAB_W)        f32  softmax probs on lanes [0:3], zeros elsewhere
    """
    f32 = jnp.float32
    xin = x_ref[...]                                             # (TB, IN_W)

    # Build one-hot(user) on lanes [ONEHOT_OFF:ONEHOT_OFF+NUM_USERS] and the
    # constant-1 bias lane with a single iota + two compares (pure VPU, no
    # cross-lane movement, no extra DMA).  Note: ids >= NUM_USERS would yield
    # an all-zero one-hot instead of raising like nn.Embedding.
    lane = jax.lax.broadcasted_iota(jnp.int32, xin.shape, 1)
    uid = xin[:, UID_LANE:UID_LANE + 1].astype(jnp.int32)        # exact: ids < 16
    hot = (lane == uid + ONEHOT_OFF) | (lane == BIAS_LANE)
    x = xin + hot.astype(f32)                                    # (TB, IN_W)

    # Layer 1: fused (embedding gather + metadata Linear + concat + CatMLP L1),
    # bias carried by the constant-1 lane -> no broadcast add.
    w1 = slab_ref[W1_OFF:W1_OFF + IN_W, :]                       # (IN_W, SLAB_W)
    h = jnp.maximum(jnp.dot(x, w1, preferred_element_type=f32), 0.0)

    # Layer 2 (constant lane re-propagates itself; padded lanes stay 0).
    w2 = slab_ref[W2_OFF:W2_OFF + SLAB_W, :]
    h = jnp.maximum(jnp.dot(h, w2, preferred_element_type=f32), 0.0)

    # Layer 3: LinRegress times & temperature pre-folded -> (TB, SLAB_W) logits
    # with the real 3 time points on lanes [0:3] and -1e30 on padded lanes.
    w3 = slab_ref[W3_OFF:W3_OFF + SLAB_W, :]
    logits = jnp.dot(h, w3, preferred_element_type=f32)

    # Full-lane softmax (padded lanes contribute exp(-1e30 - m) == 0).
    m = jnp.max(logits, axis=-1, keepdims=True)
    e = jnp.exp(logits - m)
    out_ref[...] = e / jnp.sum(e, axis=-1, keepdims=True)


# ---------------- one-time parameter folding / packing (init, not per call) ----------------
def prepare_params(raw_params):
    """Fold times/temperature, input stage and all biases into one VMEM slab."""
    emb, wm, bm, w1, b1, w2, b2, w3, b3 = raw_params        # PyTorch (out, in) layouts
    f32 = jnp.float32
    H1, H2 = HIDDEN

    W1 = w1.T.astype(f32)        # (USER_EMBED + LANG_EMBED, H1)
    W2 = w2.T.astype(f32)        # (H1, H2)
    W3 = w3.T.astype(f32)        # (H2, PARAM_DIM)
    Wm = wm.T.astype(f32)        # (META_SIZE, LANG_EMBED)

    # Fold LinRegress (y = intercept + slope*t) and the softmax temperature into
    # the last Linear: logits = params @ T / TEMP = h2 @ (W3 @ T / TEMP) + b3 @ T / TEMP
    T = jnp.array([list(TIMES), [1.0] * NUM_TIMES], f32)    # (PARAM_DIM, NUM_TIMES)
    W3f = (W3 @ T) / TEMPERATURE                            # (H2, 3)
    b3f = (b3.astype(f32) @ T) / TEMPERATURE                # (3,)

    # Fold embedding lookup + metadata Linear + concat into the first matmul:
    #   latent @ W1 = onehot @ (emb @ W1_u) + metadata @ (Wm @ W1_m) + (bm @ W1_m)
    W1_u = W1[:USER_EMBED]
    W1_m = W1[USER_EMBED:]
    A = emb.astype(f32) @ W1_u                              # (NUM_USERS, H1)
    Bm = Wm @ W1_m                                          # (META_SIZE, H1)
    b1f = bm.astype(f32) @ W1_m + b1.astype(f32)            # (H1,)

    slab = jnp.zeros((SLAB_ROWS, SLAB_W), f32)
    # --- layer 1 block (rows mirror the fused input lanes) ---
    slab = slab.at[W1_OFF:W1_OFF + META_SIZE, :H1].set(Bm)              # metadata lanes
    slab = slab.at[W1_OFF + BIAS_LANE, :H1].set(b1f)                    # bias via const-1 lane
    slab = slab.at[W1_OFF + BIAS_LANE, CONST_COL].set(1.0)              # propagate the constant 1
    slab = slab.at[W1_OFF + ONEHOT_OFF:W1_OFF + ONEHOT_OFF + NUM_USERS, :H1].set(A)
    # --- layer 2 block ---
    slab = slab.at[W2_OFF:W2_OFF + H1, :H2].set(W2)
    slab = slab.at[W2_OFF + CONST_COL, :H2].set(b2.astype(f32))
    slab = slab.at[W2_OFF + CONST_COL, CONST_COL].set(1.0)
    # --- layer 3 block (time-folded weights + softmax sentinel on pad lanes) ---
    slab = slab.at[W3_OFF:W3_OFF + H2, :NUM_TIMES].set(W3f)
    slab = slab.at[W3_OFF + CONST_COL, :NUM_TIMES].set(b3f)
    slab = slab.at[W3_OFF + CONST_COL, NUM_TIMES:].set(NEG_SENTINEL)
    return slab


# ---------------- JAX wrapper (per-call activation shaping only) ----------------
@jax.jit
def strip_temporal_cf(user_ids, metadata_items, slab):
    b = user_ids.shape[0]
    f32 = jnp.float32

    # Fused activation input: metadata on lanes [0:META_SIZE], user id as an
    # exact small float on lane UID_LANE; trailing-only zero pad to IN_W.
    xin = jnp.concatenate(
        [metadata_items.astype(f32), user_ids.astype(f32)[:, None]], axis=1)

    tile = min(TILE_B, _round_up(b, 8))          # single step for small batches
    bp = _round_up(b, tile)
    xin = jnp.pad(xin, ((0, bp - b), (0, IN_W - META_SIZE - 1)))

    cost = pl.CostEstimate(
        flops=2 * bp * SLAB_W * (IN_W + 2 * SLAB_W),
        transcendentals=bp * SLAB_W,
        bytes_accessed=4 * (bp * IN_W + SLAB_ROWS * SLAB_W + bp * SLAB_W))

    out = pl.pallas_call(
        _strip_temporal_cf_kernel,
        out_shape=jax.ShapeDtypeStruct((bp, SLAB_W), f32),
        grid_spec=pltpu.PrefetchScalarGridSpec(
            num_scalar_prefetch=0,
            grid=(bp // tile,),
            in_specs=[
                pl.BlockSpec((tile, IN_W), lambda i: (i, 0)),
                pl.BlockSpec((SLAB_ROWS, SLAB_W), lambda i: (0, 0)),  # weights stay resident
            ],
            out_specs=pl.BlockSpec((tile, SLAB_W), lambda i: (i, 0)),
        ),
        compiler_params=pltpu.CompilerParams(
            dimension_semantics=("parallel",)),      # shards batch tiles across v7x's 2 TCs
        cost_estimate=cost,
    )(xin, slab)

    # Single wrapper-side slice keeps the kernel's store lane-dense.
    return out[:b, :NUM_TIMES]


# ---------------- deterministic parameter init (PyTorch layouts) ----------------
def init_params(key):
    ks = jax.random.split(key, 9)
    emb = jax.random.normal(ks[0], (NUM_USERS, USER_EMBED), jnp.float32) * 0.1
    wm = jax.random.normal(ks[1], (LANG_EMBED, META_SIZE), jnp.float32) * 0.1
    bm = jax.random.normal(ks[2], (LANG_EMBED,), jnp.float32) * 0.01
    latent_dim = USER_EMBED + LANG_EMBED
    w1 = jax.random.normal(ks[3], (HIDDEN[0], latent_dim), jnp.float32) * 0.1
    b1 = jax.random.normal(ks[4], (HIDDEN[0],), jnp.float32) * 0.01
    w2 = jax.random.normal(ks[5], (HIDDEN[1], HIDDEN[0]), jnp.float32) * 0.1
    b2 = jax.random.normal(ks[6], (HIDDEN[1],), jnp.float32) * 0.01
    w3 = jax.random.normal(ks[7], (PARAM_DIM, HIDDEN[1]), jnp.float32) * 0.1
    b3 = jax.random.normal(ks[8], (PARAM_DIM,), jnp.float32) * 0.01
    return (emb, wm, bm, w1, b1, w2, b2, w3, b3)


# ---------------- pure-JAX reference (original, unfolded math) ----------------
def reference(user_ids, metadata_items, raw_params):
    emb, wm, bm, w1, b1, w2, b2, w3, b3 = raw_params
    user_vals = emb[user_ids]
    meta_vals = metadata_items @ wm.T + bm
    latent = jnp.concatenate([user_vals, meta_vals], axis=1)
    h = jnp.maximum(latent @ w1.T + b1, 0.0)
    h = jnp.maximum(h @ w2.T + b2, 0.0)
    p = h @ w3.T + b3
    times = jnp.array(list(TIMES), jnp.float32)
    y = p[:, 1:2] + p[:, 0:1] * times[None, :]
    return jax.nn.softmax(y / TEMPERATURE, axis=-1)


if __name__ == "__main__":
    key = jax.random.PRNGKey(0)
    k_p, k_u, k_m, k_u2, k_m2 = jax.random.split(key, 5)

    raw_params = init_params(k_p)
    slab = prepare_params(raw_params)              # one-time fold + pack

    # --- small, spec-consistent shapes (single-step grid) ---
    user_ids = jax.random.randint(k_u, (B,), 0, NUM_USERS, dtype=jnp.int32)
    metadata_items = jax.random.normal(k_m, (B, META_SIZE), jnp.float32)
    out = jax.block_until_ready(strip_temporal_cf(user_ids, metadata_items, slab))
    ref = reference(user_ids, metadata_items, raw_params)
    assert out.shape == (B, NUM_TIMES)
    assert jnp.allclose(out, ref, atol=1e-3, rtol=1e-3), (out, ref)

    # --- batched / amortized path: grid over 256-row tiles, resident slab ---
    BB = 400                                       # not a tile multiple -> exercises padding
    big_uid = jax.random.randint(k_u2, (BB,), 0, NUM_USERS, dtype=jnp.int32)
    big_meta = jax.random.normal(k_m2, (BB, META_SIZE), jnp.float32)
    out_b = jax.block_until_ready(strip_temporal_cf(big_uid, big_meta, slab))
    ref_b = reference(big_uid, big_meta, raw_params)
    assert out_b.shape == (BB, NUM_TIMES)
    assert jnp.allclose(out_b, ref_b, atol=1e-3, rtol=1e-3)

    print("KERNEL_OK")
</pallas_src>

<mosaic_0001>
module attributes {stable_mosaic.version = 11 : i64} {
  func.func @_strip_temporal_cf_kernel(%arg0: i32, %arg1: memref<8x32xf32, #tpu.memory_space<vmem>>, %arg2: memref<112x40xf32, #tpu.memory_space<vmem>>, %arg3: memref<8x40xf32, #tpu.memory_space<vmem>>) attributes {dimension_semantics = [#tpu.dimension_semantics<parallel>], iteration_bounds = array<i64: 1>, scalar_prefetch = 0 : i64, scratch_operands = 0 : i64, tpu.core_type = #tpu.core_type<tc>, window_params = [{transform_indices = @transform_0, window_bounds = array<i64: 8, 32>}, {pipeline_mode = #tpu.pipeline_mode<synchronous>, transform_indices = @transform_1, window_bounds = array<i64: 112, 40>}, {transform_indices = @transform_2, window_bounds = array<i64: 8, 40>}]} {
    %c0 = arith.constant 0 : index
    %c0_0 = arith.constant 0 : index
    %0 = vector.load %arg1[%c0, %c0_0] : memref<8x32xf32, #tpu.memory_space<vmem>>, vector<8x32xf32>
    %1 = tpu.iota {dimensions = array<i32: 1>} : vector<8x32xi32>
    %2 = vector.extract_strided_slice %0 {offsets = [0, 10], sizes = [8, 1], strides = [1, 1]} : vector<8x32xf32> to vector<8x1xf32>
    %3 = arith.fptosi %2 : vector<8x1xf32> to vector<8x1xi32>
    %c16_i32 = arith.constant 16 : i32
    %4 = vector.broadcast %c16_i32 : i32 to vector<8x1xi32>
    %5 = arith.addi %3, %4 : vector<8x1xi32>
    %6 = vector.broadcast %5 : vector<8x1xi32> to vector<8x32xi32>
    %7 = arith.cmpi eq, %1, %6 : vector<8x32xi32>
    %c11_i32 = arith.constant 11 : i32
    %8 = vector.broadcast %c11_i32 : i32 to vector<8x32xi32>
    %9 = arith.cmpi eq, %1, %8 : vector<8x32xi32>
    %10 = arith.ori %7, %9 : vector<8x32xi1>
    %11 = arith.extui %10 : vector<8x32xi1> to vector<8x32xi32>
    %12 = arith.sitofp %11 : vector<8x32xi32> to vector<8x32xf32>
    %13 = arith.addf %0, %12 : vector<8x32xf32>
    %c0_1 = arith.constant 0 : index
    %c0_2 = arith.constant 0 : index
    %14 = vector.load %arg2[%c0_1, %c0_2] : memref<112x40xf32, #tpu.memory_space<vmem>>, vector<32x40xf32>
    %cst = arith.constant dense<0.000000e+00> : vector<8x40xf32>
    %15 = tpu.matmul %13, %14, %cst {dimension_numbers = #tpu.dot_dimension_numbers<[1], [0], [0], [1], [0, 0, 1, 1], [], []>} : vector<8x32xf32>, vector<32x40xf32>, vector<8x40xf32> -> vector<8x40xf32>
    %cst_3 = arith.constant 0.000000e+00 : f32
    %16 = vector.broadcast %cst_3 : f32 to vector<8x40xf32>
    %17 = arith.maximumf %15, %16 : vector<8x40xf32>
    %c32 = arith.constant 32 : index
    %c0_4 = arith.constant 0 : index
    %18 = vector.load %arg2[%c32, %c0_4] : memref<112x40xf32, #tpu.memory_space<vmem>>, vector<40x40xf32>
    %cst_5 = arith.constant dense<0.000000e+00> : vector<8x40xf32>
    %19 = tpu.matmul %17, %18, %cst_5 {dimension_numbers = #tpu.dot_dimension_numbers<[1], [0], [0], [1], [0, 0, 1, 1], [], []>} : vector<8x40xf32>, vector<40x40xf32>, vector<8x40xf32> -> vector<8x40xf32>
    %cst_6 = arith.constant 0.000000e+00 : f32
    %20 = vector.broadcast %cst_6 : f32 to vector<8x40xf32>
    %21 = arith.maximumf %19, %20 : vector<8x40xf32>
    %c72 = arith.constant 72 : index
    %c0_7 = arith.constant 0 : index
    %22 = vector.load %arg2[%c72, %c0_7] : memref<112x40xf32, #tpu.memory_space<vmem>>, vector<40x40xf32>
    %cst_8 = arith.constant dense<0.000000e+00> : vector<8x40xf32>
    %23 = tpu.matmul %21, %22, %cst_8 {dimension_numbers = #tpu.dot_dimension_numbers<[1], [0], [0], [1], [0, 0, 1, 1], [], []>} : vector<8x40xf32>, vector<40x40xf32>, vector<8x40xf32> -> vector<8x40xf32>
    %cst_9 = arith.constant dense<0xFF800000> : vector<8xf32>
    %24 = vector.multi_reduction <maximumf>, %23, %cst_9 [1] : vector<8x40xf32> to vector<8xf32>
    %25 = vector.shape_cast %24 : vector<8xf32> to vector<8x1xf32>
    %26 = vector.broadcast %25 : vector<8x1xf32> to vector<8x40xf32>
    %27 = arith.subf %23, %26 : vector<8x40xf32>
    %28 = math.exp %27 : vector<8x40xf32>
    %cst_10 = arith.constant dense<0.000000e+00> : vector<8xf32>
    %29 = vector.multi_reduction <add>, %28, %cst_10 [1] : vector<8x40xf32> to vector<8xf32>
    %30 = vector.shape_cast %29 : vector<8xf32> to vector<8x1xf32>
    %31 = vector.broadcast %30 : vector<8x1xf32> to vector<8x40xf32>
    %32 = arith.divf %28, %31 : vector<8x40xf32>
    %c0_11 = arith.constant 0 : index
    %c0_12 = arith.constant 0 : index
    %33 = vector.load %arg3[%c0_11, %c0_12] : memref<8x40xf32, #tpu.memory_space<vmem>>, vector<8x40xf32>
    tpu.vector_store %arg3[%c0_11, %c0_12], %32 {strides = array<i32>} : memref<8x40xf32, #tpu.memory_space<vmem>>, vector<8x40xf32>,
    return
  }
  func.func @transform_0(%arg0: i32) -> (i32, i32) {
    %c0_i32 = arith.constant 0 : i32
    %c0_i32_0 = arith.constant 0 : i32
    return %arg0, %c0_i32 : i32, i32
  }
  func.func @transform_1(%arg0: i32) -> (i32, i32) {
    %c0_i32 = arith.constant 0 : i32
    %c0_i32_0 = arith.constant 0 : i32
    %c0_i32_1 = arith.constant 0 : i32
    return %c0_i32, %c0_i32_0 : i32, i32
  }
  func.func @transform_2(%arg0: i32) -> (i32, i32) {
    %c0_i32 = arith.constant 0 : i32
    %c0_i32_0 = arith.constant 0 : i32
    return %arg0, %c0_i32 : i32, i32
  }
}

</mosaic_0001>

<llo_original>
// kernel: strip_temporal_cf.1
$region0: #{strip_temporal_cf.1}
  #allocation0 [shape = 'u32[]', space=smem, size = 0x4, offset = 0x4, fixed_abs, tag = 'smem constant byte address 0x4 - core index']
  #allocation1 [shape = 'u32[144,128]{1,0:T(1,128)}', space=vmem, size = 0x12000, scoped, tag = 'internal scratch']
  %s0 = inlined_call_operand.vmem [shape: f32[8,32], index: 0, kind: input, shape index: {}]
  %s1 = inlined_call_operand.vmem [shape: f32[112,40], index: 1, kind: input, shape index: {}]
  %s2 = inlined_call_operand.vmem [shape: f32[8,40], index: 2, kind: output, shape index: {}]
  %s3 = sld [smem:[#allocation0]]
  $region18: #{strip_temporal_cf.1} parent=0
    _
  %s5 = ssub.s32 1, %s3
  %s6 = scalar_select 0, %s5, %s3
  // Predicated region
  $region2: #{strip_temporal_cf.1} parent=0 // pred_check
    _
  $region3: #{strip_temporal_cf.1} parent=0 // pred_check_branch
    %8 = sbr.rel (0) target = $region5
  $region4: #{strip_temporal_cf.1} parent=0 // pred_region
    _
  $region5: #{strip_temporal_cf.1} parent=0 // pred_fallthru
    _
  // Predicated region
  $region6: #{strip_temporal_cf.1} parent=0 // pred_check
    _
  $region7: #{strip_temporal_cf.1} parent=0 // pred_check_branch
    %10 = sbr.rel (0) target = $region9
  $region8: #{strip_temporal_cf.1} parent=0 // pred_region
    _
  $region9: #{strip_temporal_cf.1} parent=0 // pred_fallthru
    _
  %v11 = vld [vmem:[%s0] sm:$0xff]
  %v12 = vlaneseq
  %v13 = vand.u32 %v12, 127
  %v14 = vcvt.f32.s32.to.zero.pseudo %v11
  %v15 = vadd.s32 %v14, 16
  %16 = vset.pattern.permute.xlu0 10
  %17 = vperm.xlu0 %16, %v15
  %v18 = vpop.permute.xlu0 %17
  %vm19 = vcmp.eq.s32.totalorder %v13, %v18
  %vm20 = vcmp.eq.s32.totalorder %v13, 11
  %vm21 = vmor %vm19, %vm20
  %v22 = vsel %vm21, 1, 0
  %v23 = vcvt.s32.f32 %v22
  %v24 = vadd.f32 %v11, %v23
  %v25 = vld [vmem:[%s1] sm:$0xff]
  %v26 = vld [vmem:[%s1 + $0x8] sm:$0xff]
  %v27 = vld [vmem:[%s1 + $0x10] sm:$0xff]
  %v28 = vld [vmem:[%s1 + $0x18] sm:$0xff]
  %vm29 = vcmask 261120
  %v31 = vsel %vm29, %v24, 0
  %33 = vmatprep.subr.mxu0 0.0
  %34 = vmatpush1.msra.mxu0 0.0
  %35 = vmatprep.subr.mxu0 0.0
  %36 = vmatpush1.msra.mxu0 0.0
  %37 = vmatprep.subr.mxu0 0.0
  %38 = vmatpush1.msra.mxu0 0.0
  %39 = vmatprep.subr.mxu0 0.0
  %40 = vmatpush1.msra.mxu0 0.0
  %41 = vmatprep.subr.mxu0 0.0
  %42 = vmatpush1.msra.mxu0 0.0
  %43 = vmatprep.subr.mxu0 0.0
  %44 = vmatpush1.msra.mxu0 0.0
  %45 = vmatprep.subr.mxu0 0.0
  %46 = vmatpush1.msra.mxu0 0.0
  %47 = vmatprep.subr.mxu0 0.0
  %48 = vmatpush1.msra.mxu0 0.0
  %49 = vmatprep.subr.mxu0 0.0
  %50 = vmatpush1.msra.mxu0 0.0
  %51 = vmatprep.subr.mxu0 0.0
  %52 = vmatpush1.msra.mxu0 0.0
  %53 = vmatprep.subr.mxu0 0.0
  %54 = vmatpush1.msra.mxu0 0.0
  %55 = vmatprep.subr.mxu0 0.0
  %56 = vmatpush1.msra.mxu0 0.0
  %57 = vmatprep.subr.mxu0 0.0
  %58 = vmatpush1.msra.mxu0 %v28
  %59 = vmatprep.subr.mxu0 0.0
  %60 = vmatpush1.msra.mxu0 %v27
  %61 = vmatprep.subr.mxu0 0.0
  %62 = vmatpush1.msra.mxu0 %v26
  %63 = vmatprep.subr.mxu0 0.0
  %64 = vmatpush1.msra.mxu0 %v25
  %65 = vmatprep.subr.mxu0 0.0
  %66 = vmatpush2.msra.mxu0 0.0
  %67 = vmatprep.subr.mxu0 0.0
  %68 = vmatpush2.msra.mxu0 0.0
  %69 = vmatprep.subr.mxu0 0.0
  %70 = vmatpush2.msra.mxu0 0.0
  %71 = vmatprep.subr.mxu0 0.0
  %72 = vmatpush2.msra.mxu0 0.0
  %73 = vmatprep.subr.mxu0 0.0
  %74 = vmatpush2.msra.mxu0 0.0
  %75 = vmatprep.subr.mxu0 0.0
  %76 = vmatpush2.msra.mxu0 0.0
  %77 = vmatprep.subr.mxu0 0.0
  %78 = vmatpush2.msra.mxu0 0.0
  %79 = vmatprep.subr.mxu0 0.0
  %80 = vmatpush2.msra.mxu0 0.0
  %81 = vmatprep.subr.mxu0 0.0
  %82 = vmatpush2.msra.mxu0 0.0
  %83 = vmatprep.subr.mxu0 0.0
  %84 = vmatpush2.msra.mxu0 0.0
  %85 = vmatprep.subr.mxu0 0.0
  %86 = vmatpush2.msra.mxu0 0.0
  %87 = vmatprep.subr.mxu0 0.0
  %88 = vmatpush2.msra.mxu0 0.0
  %89 = vmatprep.subr.mxu0 0.0
  %90 = vmatpush2.msra.mxu0 0.0
  %91 = vmatprep.subr.mxu0 0.0
  %92 = vmatpush2.msra.mxu0 0.0
  %93 = vmatprep.subr.mxu0 0.0
  %94 = vmatpush2.msra.mxu0 0.0
  %95 = vmatprep.subr.mxu0 0.0
  %96 = vmatpush2.msra.mxu0 0.0
  %97 = vmatprep.mubr.f32.mxu0 0.0
  %98 = vmatmul.mubr.f32.gmra.mxu0 %v31
  %v99 = vpop.f32.mrf.mxu0
  %v100 = vadd.f32 0.0, %v99
  %v101 = vpop.f32.mrf.mxu0
  %102 = vdwg.mxu0
  %v103 = vmax.f32 %v100, 0.0
  %v104 = vld [vmem:[%s1 + $0x20] sm:$0xff]
  %v105 = vld [vmem:[%s1 + $0x28] sm:$0xff]
  %v106 = vld [vmem:[%s1 + $0x30] sm:$0xff]
  %v107 = vld [vmem:[%s1 + $0x38] sm:$0xff]
  %v108 = vld [vmem:[%s1 + $0x40] sm:$0xff]
  %vm109 = vcmask 326656
  %v111 = vsel %vm109, %v103, 0
  %113 = vmatprep.subr.mxu0 0.0
  %114 = vmatpush1.msra.mxu0 0.0
  %115 = vmatprep.subr.mxu0 0.0
  %116 = vmatpush1.msra.mxu0 0.0
  %117 = vmatprep.subr.mxu0 0.0
  %118 = vmatpush1.msra.mxu0 0.0
  %119 = vmatprep.subr.mxu0 0.0
  %120 = vmatpush1.msra.mxu0 0.0
  %121 = vmatprep.subr.mxu0 0.0
  %122 = vmatpush1.msra.mxu0 0.0
  %123 = vmatprep.subr.mxu0 0.0
  %124 = vmatpush1.msra.mxu0 0.0
  %125 = vmatprep.subr.mxu0 0.0
  %126 = vmatpush1.msra.mxu0 0.0
  %127 = vmatprep.subr.mxu0 0.0
  %128 = vmatpush1.msra.mxu0 0.0
  %129 = vmatprep.subr.mxu0 0.0
  %130 = vmatpush1.msra.mxu0 0.0
  %131 = vmatprep.subr.mxu0 0.0
  %132 = vmatpush1.msra.mxu0 0.0
  %133 = vmatprep.subr.mxu0 0.0
  %134 = vmatpush1.msra.mxu0 0.0
  %135 = vmatprep.subr.mxu0 0.0
  %136 = vmatpush1.msra.mxu0 %v108
  %137 = vmatprep.subr.mxu0 0.0
  %138 = vmatpush1.msra.mxu0 %v107
  %139 = vmatprep.subr.mxu0 0.0
  %140 = vmatpush1.msra.mxu0 %v106
  %141 = vmatprep.subr.mxu0 0.0
  %142 = vmatpush1.msra.mxu0 %v105
  %143 = vmatprep.subr.mxu0 0.0
  %144 = vmatpush1.msra.mxu0 %v104
  %145 = vmatprep.subr.mxu0 0.0
  %146 = vmatpush2.msra.mxu0 0.0
  %147 = vmatprep.subr.mxu0 0.0
  %148 = vmatpush2.msra.mxu0 0.0
  %149 = vmatprep.subr.mxu0 0.0
  %150 = vmatpush2.msra.mxu0 0.0
  %151 = vmatprep.subr.mxu0 0.0
  %152 = vmatpush2.msra.mxu0 0.0
  %153 = vmatprep.subr.mxu0 0.0
  %154 = vmatpush2.msra.mxu0 0.0
  %155 = vmatprep.subr.mxu0 0.0
  %156 = vmatpush2.msra.mxu0 0.0
  %157 = vmatprep.subr.mxu0 0.0
  %158 = vmatpush2.msra.mxu0 0.0
  %159 = vmatprep.subr.mxu0 0.0
  %160 = vmatpush2.msra.mxu0 0.0
  %161 = vmatprep.subr.mxu0 0.0
  %162 = vmatpush2.msra.mxu0 0.0
  %163 = vmatprep.subr.mxu0 0.0
  %164 = vmatpush2.msra.mxu0 0.0
  %165 = vmatprep.subr.mxu0 0.0
  %166 = vmatpush2.msra.mxu0 0.0
  %167 = vmatprep.subr.mxu0 0.0
  %168 = vmatpush2.msra.mxu0 0.0
  %169 = vmatprep.subr.mxu0 0.0
  %170 = vmatpush2.msra.mxu0 0.0
  %171 = vmatprep.subr.mxu0 0.0
  %172 = vmatpush2.msra.mxu0 0.0
  %173 = vmatprep.subr.mxu0 0.0
  %174 = vmatpush2.msra.mxu0 0.0
  %175 = vmatprep.subr.mxu0 0.0
  %176 = vmatpush2.msra.mxu0 0.0
  %177 = vmatprep.mubr.f32.mxu0 0.0
  %178 = vmatmul.mubr.f32.gmra.mxu0 %v111
  %v179 = vpop.f32.mrf.mxu0
  %v180 = vadd.f32 0.0, %v179
  %v181 = vpop.f32.mrf.mxu0
  %182 = vdwg.mxu0
  %v183 = vmax.f32 %v180, 0.0
  %v184 = vld [vmem:[%s1 + $0x48] sm:$0xff]
  %v185 = vld [vmem:[%s1 + $0x50] sm:$0xff]
  %v186 = vld [vmem:[%s1 + $0x58] sm:$0xff]
  %v187 = vld [vmem:[%s1 + $0x60] sm:$0xff]
  %v188 = vld [vmem:[%s1 + $0x68] sm:$0xff]
  %v190 = vsel %vm109, %v183, 0
  %192 = vmatprep.subr.mxu0 0.0
  %193 = vmatpush1.msra.mxu0 0.0
  %194 = vmatprep.subr.mxu0 0.0
  %195 = vmatpush1.msra.mxu0 0.0
  %196 = vmatprep.subr.mxu0 0.0
  %197 = vmatpush1.msra.mxu0 0.0
  %198 = vmatprep.subr.mxu0 0.0
  %199 = vmatpush1.msra.mxu0 0.0
  %200 = vmatprep.subr.mxu0 0.0
  %201 = vmatpush1.msra.mxu0 0.0
  %202 = vmatprep.subr.mxu0 0.0
  %203 = vmatpush1.msra.mxu0 0.0
  %204 = vmatprep.subr.mxu0 0.0
  %205 = vmatpush1.msra.mxu0 0.0
  %206 = vmatprep.subr.mxu0 0.0
  %207 = vmatpush1.msra.mxu0 0.0
  %208 = vmatprep.subr.mxu0 0.0
  %209 = vmatpush1.msra.mxu0 0.0
  %210 = vmatprep.subr.mxu0 0.0
  %211 = vmatpush1.msra.mxu0 0.0
  %212 = vmatprep.subr.mxu0 0.0
  %213 = vmatpush1.msra.mxu0 0.0
  %214 = vmatprep.subr.mxu0 0.0
  %215 = vmatpush1.msra.mxu0 %v188
  %216 = vmatprep.subr.mxu0 0.0
  %217 = vmatpush1.msra.mxu0 %v187
  %218 = vmatprep.subr.mxu0 0.0
  %219 = vmatpush1.msra.mxu0 %v186
  %220 = vmatprep.subr.mxu0 0.0
  %221 = vmatpush1.msra.mxu0 %v185
  %222 = vmatprep.subr.mxu0 0.0
  %223 = vmatpush1.msra.mxu0 %v184
  %224 = vmatprep.subr.mxu0 0.0
  %225 = vmatpush2.msra.mxu0 0.0
  %226 = vmatprep.subr.mxu0 0.0
  %227 = vmatpush2.msra.mxu0 0.0
  %228 = vmatprep.subr.mxu0 0.0
  %229 = vmatpush2.msra.mxu0 0.0
  %230 = vmatprep.subr.mxu0 0.0
  %231 = vmatpush2.msra.mxu0 0.0
  %232 = vmatprep.subr.mxu0 0.0
  %233 = vmatpush2.msra.mxu0 0.0
  %234 = vmatprep.subr.mxu0 0.0
  %235 = vmatpush2.msra.mxu0 0.0
  %236 = vmatprep.subr.mxu0 0.0
  %237 = vmatpush2.msra.mxu0 0.0
  %238 = vmatprep.subr.mxu0 0.0
  %239 = vmatpush2.msra.mxu0 0.0
  %240 = vmatprep.subr.mxu0 0.0
  %241 = vmatpush2.msra.mxu0 0.0
  %242 = vmatprep.subr.mxu0 0.0
  %243 = vmatpush2.msra.mxu0 0.0
  %244 = vmatprep.subr.mxu0 0.0
  %245 = vmatpush2.msra.mxu0 0.0
  %246 = vmatprep.subr.mxu0 0.0
  %247 = vmatpush2.msra.mxu0 0.0
  %248 = vmatprep.subr.mxu0 0.0
  %249 = vmatpush2.msra.mxu0 0.0
  %250 = vmatprep.subr.mxu0 0.0
  %251 = vmatpush2.msra.mxu0 0.0
  %252 = vmatprep.subr.mxu0 0.0
  %253 = vmatpush2.msra.mxu0 0.0
  %254 = vmatprep.subr.mxu0 0.0
  %255 = vmatpush2.msra.mxu0 0.0
  %256 = vmatprep.mubr.f32.mxu0 0.0
  %257 = vmatmul.mubr.f32.gmra.mxu0 %v190
  %v258 = vpop.f32.mrf.mxu0
  %v259 = vadd.f32 0.0, %v258
  %v260 = vpop.f32.mrf.mxu0
  %261 = vdwg.mxu0
  %v262 = vsel %vm109, %v259, -inf
  %263 = vmax.xlane.f32.xlu0 %v262
  %v264 = vpop.xlane.xlu0 %263
  %v265 = vsub.f32 %v259, %v264
  %v266 = vmul.f32 %v265, 1.442695
  %v267 = vpow.pop %v266
  %v268 = vsel %vm109, %v267, 0.0
  %269 = vadd.xlane.f32.xlu0 %v268
  %v270 = vpop.xlane.xlu0 %269
  %v271 = vrcp.pop %v270
  %v272 = vmul.f32 %v267, %v271
  %273 = vst.msk [vmem:[%s2] sm:$0xff] %vm109, %v272
  // Predicated region
  $region10: #{strip_temporal_cf.1} parent=0 // pred_check
    _
  $region11: #{strip_temporal_cf.1} parent=0 // pred_check_branch
    %275 = sbr.rel (0) target = $region13
  $region12: #{strip_temporal_cf.1} parent=0 // pred_region
    _
  $region13: #{strip_temporal_cf.1} parent=0 // pred_fallthru
    _
  // Predicated region
  $region14: #{strip_temporal_cf.1} parent=0 // pred_check
    _
  $region15: #{strip_temporal_cf.1} parent=0 // pred_check_branch
    %277 = sbr.rel (0) target = $region17
  $region16: #{strip_temporal_cf.1} parent=0 // pred_region
    _
  $region17: #{strip_temporal_cf.1} parent=0 // pred_fallthru
    _

</llo_original>
